<compile_context>
chip_gen: v5e
topology: v5e:2x2
jax: 0.10.0
libtpu: 0.0.40
codegen_flags: <defaults>
</compile_context>

<pallas_src>
import functools
import math

import jax
import jax.numpy as jnp
from jax import lax
from jax.experimental import pallas as pl
from jax.experimental.pallas import tpu as pltpu

# ---- model config (small, consistent with the module) ----
BATCH = 2
SEQ = 8
EMBED_DIM = 32
NUM_HEADS = 4


def _mha_kernel(x_ref, wqkv_ref, bqkv_ref, wout_ref, bout_ref, o_ref, *, num_heads):
    """Whole-batch MHA forward in one invocation; all operands VMEM-resident.

    x_ref:    (B, S, E)
    wqkv_ref: (B*H, E, 3*D)   per-(batch, head) QKV weights (scale folded into Q part)
    bqkv_ref: (B*H, 1, 3*D)   per-(batch, head) QKV bias    (scale folded into Q part)
    wout_ref: (B*H, D, E)     per-head row-slice of the output projection
    bout_ref: (1, 1, E)
    o_ref:    (B, S, E)
    """
    B, S, E = x_ref.shape
    H = num_heads
    D = E // H
    BH = B * H

    # Replicate activations per head along a new MAJOR axis: (B,S,E) -> (B*H,S,E).
    # Broadcast + major-dim reshape only -> pure vreg copies, no sublane/lane relayout.
    x = x_ref[...]
    xh = jnp.broadcast_to(x[:, None], (B, H, S, E)).reshape(BH, S, E)

    # Fused per-(batch, head) QKV projection: one batched MXU dot_general.
    qkv = lax.dot_general(
        xh, wqkv_ref[...],
        dimension_numbers=(((2,), (1,)), ((0,), (0,))),
        preferred_element_type=jnp.float32) + bqkv_ref[...]          # (BH, S, 3D)

    q = qkv[..., 0 * D:1 * D]        # already scaled by 1/sqrt(D) via the weights
    k = qkv[..., 1 * D:2 * D]
    v = qkv[..., 2 * D:3 * D]

    # Scores: contract head_dim of Q against head_dim of K directly (no K transpose).
    s = lax.dot_general(
        q, k, dimension_numbers=(((2,), (2,)), ((0,), (0,))),
        preferred_element_type=jnp.float32)                          # (BH, S, S)

    # One batched softmax over every (batch, head) tile.
    s = s - jnp.max(s, axis=-1, keepdims=True)
    p = jnp.exp(s)
    # approx=True -> EUP vrcp slot (otherwise idle); fine for a softmax normalizer.
    p = p * pl.reciprocal(jnp.sum(p, axis=-1, keepdims=True), approx=True)

    # P @ V, batched over (batch, head).
    o = lax.dot_general(
        p, v, dimension_numbers=(((2,), (1,)), ((0,), (0,))),
        preferred_element_type=jnp.float32)                          # (BH, S, D)

    # Per-head slice of the output projection, then reduce over heads (major-axis sum).
    # The merged-head activations never round-trip through a VMEM scratch.
    oh = lax.dot_general(
        o, wout_ref[...], dimension_numbers=(((2,), (1,)), ((0,), (0,))),
        preferred_element_type=jnp.float32)                          # (BH, S, E)
    out = jnp.sum(oh.reshape(B, H, S, E), axis=1) + bout_ref[...]    # (B, S, E)
    o_ref[...] = out.astype(o_ref.dtype)


def prepare_mha_params(w_qkv, b_qkv, w_out, b_out, *, num_heads, batch):
    """One-time transform of the (torch-transposed) Linear params into the kernel's
    per-(batch, head) layout. Constant-folds 1/sqrt(head_dim) into the Q projection.
    Do this once at model setup, NOT per forward call.

    w_qkv: (E, 3E)   b_qkv: (3E,)   w_out: (E, E)   b_out: (E,)
    """
    E = w_out.shape[0]
    H = num_heads
    D = E // H
    scale = 1.0 / math.sqrt(D)

    def split_heads(w):   # (E, E) -> (H, E, D): column h*D+d -> [h, :, d]
        return w.reshape(E, H, D).transpose(1, 0, 2)

    wq, wk, wv = w_qkv[:, :E], w_qkv[:, E:2 * E], w_qkv[:, 2 * E:]
    bq, bk, bv = b_qkv[:E], b_qkv[E:2 * E], b_qkv[2 * E:]

    wqkv_h = jnp.concatenate(
        [split_heads(wq) * scale, split_heads(wk), split_heads(wv)], axis=-1)     # (H, E, 3D)
    bqkv_h = jnp.concatenate(
        [bq.reshape(H, D) * scale, bk.reshape(H, D), bv.reshape(H, D)], axis=-1)  # (H, 3D)
    wout_h = w_out.reshape(H, D, E)                                               # (H, D, E)

    # Replicate across batch so every in-kernel dot_general has a single (B*H) batch
    # dim and the kernel needs zero transposes. Fine at toy sizes; for large B use a
    # batch grid axis with a constant weight index_map instead of replication.
    BH = batch * H
    wqkv_bh = jnp.broadcast_to(wqkv_h[None], (batch, H, E, 3 * D)).reshape(BH, E, 3 * D)
    bqkv_bh = jnp.broadcast_to(bqkv_h[None], (batch, H, 3 * D)).reshape(BH, 1, 3 * D)
    wout_bh = jnp.broadcast_to(wout_h[None], (batch, H, D, E)).reshape(BH, D, E)
    bout = b_out.reshape(1, 1, E)
    return wqkv_bh, bqkv_bh, wout_bh, bout


def mha_forward(x, wqkv_bh, bqkv_bh, wout_bh, bout, num_heads=NUM_HEADS):
    """x: (B, S, E); prepared params from prepare_mha_params."""
    B, S, E = x.shape
    vmem = pl.BlockSpec(memory_space=pltpu.MemorySpace.VMEM)
    # Gridless single invocation: footprint ~40 KiB, far under every generation's VMEM
    # (including v7x's 64 MiB), so no grid / pipelining / vmem_limit override needed.
    return pl.pallas_call(
        functools.partial(_mha_kernel, num_heads=num_heads),
        out_shape=jax.ShapeDtypeStruct((B, S, E), x.dtype),
        in_specs=[vmem, vmem, vmem, vmem, vmem],
        out_specs=vmem,
    )(x, wqkv_bh, bqkv_bh, wout_bh, bout)


def mha_reference(x, w_qkv, b_qkv, w_out, b_out, num_heads=NUM_HEADS):
    """Pure-JAX reference mirroring the torch forward (eval mode, no mask)."""
    B, S, E = x.shape
    D = E // num_heads
    scale = 1.0 / math.sqrt(D)
    qkv = jnp.einsum("bse,ef->bsf", x, w_qkv) + b_qkv
    q, k, v = jnp.split(qkv, 3, axis=-1)

    def heads(t):
        return t.reshape(B, S, num_heads, D).transpose(0, 2, 1, 3)

    q, k, v = heads(q), heads(k), heads(v)
    s = jnp.einsum("bhqd,bhkd->bhqk", q, k) * scale
    p = jax.nn.softmax(s, axis=-1)
    o = jnp.einsum("bhqk,bhkd->bhqd", p, v)
    o = o.transpose(0, 2, 1, 3).reshape(B, S, E)
    return jnp.einsum("bse,ef->bsf", o, w_out) + b_out


if __name__ == "__main__":
    key = jax.random.PRNGKey(0)
    kx, kw1, kb1, kw2, kb2 = jax.random.split(key, 5)

    x = jax.random.normal(kx, (BATCH, SEQ, EMBED_DIM), dtype=jnp.float32)

    # Deterministic synthetic nn.Linear parameters, stored transposed vs torch
    # so the kernel computes y = x @ W + b.
    w_qkv = jax.random.normal(kw1, (EMBED_DIM, 3 * EMBED_DIM), jnp.float32) * 0.05
    b_qkv = jax.random.normal(kb1, (3 * EMBED_DIM,), jnp.float32) * 0.05
    w_out = jax.random.normal(kw2, (EMBED_DIM, EMBED_DIM), jnp.float32) * 0.05
    b_out = jax.random.normal(kb2, (EMBED_DIM,), jnp.float32) * 0.05

    # One-time parameter preparation (head split, batch replication, scale fold).
    params = prepare_mha_params(w_qkv, b_qkv, w_out, b_out,
                                num_heads=NUM_HEADS, batch=BATCH)

    out = mha_forward(x, *params)
    out = jax.block_until_ready(out)

    ref = mha_reference(x, w_qkv, b_qkv, w_out, b_out)
    assert out.shape == (BATCH, SEQ, EMBED_DIM)
    # Tolerance slightly looser than exact softmax because the kernel uses the
    # approximate EUP reciprocal for the softmax normalizer.
    assert jnp.allclose(out, ref, atol=2e-3, rtol=2e-3), "mismatch vs reference"

    print("KERNEL_OK")
</pallas_src>

<mosaic_0001>
module attributes {stable_mosaic.version = 11 : i64} {
  func.func @_mha_kernel(%arg0: memref<2x8x32xf32, #tpu.memory_space<vmem>>, %arg1: memref<8x32x24xf32, #tpu.memory_space<vmem>>, %arg2: memref<8x1x24xf32, #tpu.memory_space<vmem>>, %arg3: memref<8x8x32xf32, #tpu.memory_space<vmem>>, %arg4: memref<1x1x32xf32, #tpu.memory_space<vmem>>, %arg5: memref<2x8x32xf32, #tpu.memory_space<vmem>>) attributes {dimension_semantics = [], scalar_prefetch = 0 : i64, scratch_operands = 0 : i64, tpu.core_type = #tpu.core_type<tc>} {
    %c0 = arith.constant 0 : index
    %c0_0 = arith.constant 0 : index
    %c0_1 = arith.constant 0 : index
    %0 = vector.load %arg0[%c0, %c0_0, %c0_1] : memref<2x8x32xf32, #tpu.memory_space<vmem>>, vector<2x8x32xf32>
    %1 = vector.shape_cast %0 : vector<2x8x32xf32> to vector<2x1x8x32xf32>
    %2 = vector.shape_cast %1 : vector<2x1x8x32xf32> to vector<2x1x8x32xf32>
    %3 = vector.broadcast %2 : vector<2x1x8x32xf32> to vector<2x4x8x32xf32>
    %4 = vector.shape_cast %3 : vector<2x4x8x32xf32> to vector<8x8x32xf32>
    %c0_2 = arith.constant 0 : index
    %c0_3 = arith.constant 0 : index
    %c0_4 = arith.constant 0 : index
    %5 = vector.load %arg1[%c0_2, %c0_3, %c0_4] : memref<8x32x24xf32, #tpu.memory_space<vmem>>, vector<8x32x24xf32>
    %cst = arith.constant dense<0.000000e+00> : vector<8x8x24xf32>
    %6 = tpu.matmul %4, %5, %cst {dimension_numbers = #tpu.dot_dimension_numbers<[2], [1], [1], [2], [0, 0, 0, 1, 1, 2], [0], [0]>} : vector<8x8x32xf32>, vector<8x32x24xf32>, vector<8x8x24xf32> -> vector<8x8x24xf32>
    %c0_5 = arith.constant 0 : index
    %c0_6 = arith.constant 0 : index
    %c0_7 = arith.constant 0 : index
    %7 = vector.load %arg2[%c0_5, %c0_6, %c0_7] : memref<8x1x24xf32, #tpu.memory_space<vmem>>, vector<8x1x24xf32>
    %8 = vector.broadcast %7 : vector<8x1x24xf32> to vector<8x8x24xf32>
    %9 = arith.addf %6, %8 : vector<8x8x24xf32>
    %10 = vector.extract_strided_slice %9 {offsets = [0, 0, 0], sizes = [8, 8, 8], strides = [1, 1, 1]} : vector<8x8x24xf32> to vector<8x8x8xf32>
    %11 = vector.extract_strided_slice %9 {offsets = [0, 0, 8], sizes = [8, 8, 8], strides = [1, 1, 1]} : vector<8x8x24xf32> to vector<8x8x8xf32>
    %12 = vector.extract_strided_slice %9 {offsets = [0, 0, 16], sizes = [8, 8, 8], strides = [1, 1, 1]} : vector<8x8x24xf32> to vector<8x8x8xf32>
    %cst_8 = arith.constant dense<0.000000e+00> : vector<8x8x8xf32>
    %13 = tpu.matmul %10, %11, %cst_8 {dimension_numbers = #tpu.dot_dimension_numbers<[2], [2], [1], [1], [0, 0, 0, 1, 1, 1], [0], [0]>} : vector<8x8x8xf32>, vector<8x8x8xf32>, vector<8x8x8xf32> -> vector<8x8x8xf32>
    %cst_9 = arith.constant dense<0xFF800000> : vector<8x8xf32>
    %14 = vector.multi_reduction <maximumf>, %13, %cst_9 [2] : vector<8x8x8xf32> to vector<8x8xf32>
    %15 = vector.shape_cast %14 : vector<8x8xf32> to vector<8x8x1xf32>
    %16 = vector.broadcast %15 : vector<8x8x1xf32> to vector<8x8x8xf32>
    %17 = arith.subf %13, %16 : vector<8x8x8xf32>
    %18 = math.exp %17 : vector<8x8x8xf32>
    %cst_10 = arith.constant dense<0.000000e+00> : vector<8x8xf32>
    %19 = vector.multi_reduction <add>, %18, %cst_10 [2] : vector<8x8x8xf32> to vector<8x8xf32>
    %20 = vector.shape_cast %19 : vector<8x8xf32> to vector<8x8x1xf32>
    %21 = tpu.reciprocal %20 {approx = true} : vector<8x8x1xf32> -> vector<8x8x1xf32>
    %22 = vector.broadcast %21 : vector<8x8x1xf32> to vector<8x8x8xf32>
    %23 = arith.mulf %18, %22 : vector<8x8x8xf32>
    %cst_11 = arith.constant dense<0.000000e+00> : vector<8x8x8xf32>
    %24 = tpu.matmul %23, %12, %cst_11 {dimension_numbers = #tpu.dot_dimension_numbers<[2], [1], [1], [2], [0, 0, 0, 1, 1, 2], [0], [0]>} : vector<8x8x8xf32>, vector<8x8x8xf32>, vector<8x8x8xf32> -> vector<8x8x8xf32>
    %c0_12 = arith.constant 0 : index
    %c0_13 = arith.constant 0 : index
    %c0_14 = arith.constant 0 : index
    %25 = vector.load %arg3[%c0_12, %c0_13, %c0_14] : memref<8x8x32xf32, #tpu.memory_space<vmem>>, vector<8x8x32xf32>
    %cst_15 = arith.constant dense<0.000000e+00> : vector<8x8x32xf32>
    %26 = tpu.matmul %24, %25, %cst_15 {dimension_numbers = #tpu.dot_dimension_numbers<[2], [1], [1], [2], [0, 0, 0, 1, 1, 2], [0], [0]>} : vector<8x8x8xf32>, vector<8x8x32xf32>, vector<8x8x32xf32> -> vector<8x8x32xf32>
    %27 = vector.shape_cast %26 : vector<8x8x32xf32> to vector<2x4x8x32xf32>
    %cst_16 = arith.constant dense<0.000000e+00> : vector<2x8x32xf32>
    %28 = vector.multi_reduction <add>, %27, %cst_16 [1] : vector<2x4x8x32xf32> to vector<2x8x32xf32>
    %c0_17 = arith.constant 0 : index
    %c0_18 = arith.constant 0 : index
    %c0_19 = arith.constant 0 : index
    %29 = vector.load %arg4[%c0_17, %c0_18, %c0_19] : memref<1x1x32xf32, #tpu.memory_space<vmem>>, vector<1x1x32xf32>
    %30 = vector.broadcast %29 : vector<1x1x32xf32> to vector<2x8x32xf32>
    %31 = arith.addf %28, %30 : vector<2x8x32xf32>
    %c0_20 = arith.constant 0 : index
    %c0_21 = arith.constant 0 : index
    %c0_22 = arith.constant 0 : index
    %32 = vector.load %arg5[%c0_20, %c0_21, %c0_22] : memref<2x8x32xf32, #tpu.memory_space<vmem>>, vector<2x8x32xf32>
    tpu.vector_store %arg5[%c0_20, %c0_21, %c0_22], %31 {strides = array<i32>} : memref<2x8x32xf32, #tpu.memory_space<vmem>>, vector<2x8x32xf32>,
    return
  }
}

</mosaic_0001>

<llo_original>
// kernel: tpu_custom_call.1
$region0: #{tpu_custom_call.1}
  #allocation0 [shape = 'u32[]', space=smem, size = 0x4, offset = 0x4, fixed_abs, tag = 'smem constant byte address 0x4 - core index']
  #allocation1 [shape = 'u32[72,128]{1,0:T(1,128)}', space=vmem, size = 0x9000, scoped, tag = 'internal scratch']
  %s0 = inlined_call_operand.vmem [shape: f32[2,8,32], index: 0, kind: input, shape index: {}]
  %s1 = inlined_call_operand.vmem [shape: f32[8,32,24], index: 1, kind: input, shape index: {}]
  %s2 = inlined_call_operand.vmem [shape: f32[8,1,24], index: 2, kind: input, shape index: {}]
  %s3 = inlined_call_operand.vmem [shape: f32[8,8,32], index: 3, kind: input, shape index: {}]
  %s4 = inlined_call_operand.vmem [shape: f32[1,1,32], index: 4, kind: input, shape index: {}]
  %s5 = inlined_call_operand.hbm [shape: f32[2,8,32], index: 5, kind: output, shape index: {}]
  %s6 = sld [smem:[#allocation0]]
  $region30: #{tpu_custom_call.1} parent=0
    _
  %s8 = ssub.s32 1, %s6
  %s9 = scalar_select 0, %s8, %s6
  $region1: #{tpu_custom_call.1} parent=0
    #allocation2 [shape = 'u8[8192]{0}', space=vmem, size = 0x2000, scoped, tag = 'output window, operand 0, single buffered']
    #allocation3 [shape = 's32[1]{0}', space=sflag, size = 0x4, scoped, tag = 'scoped memory for tpu_custom_call.1']
    %10 = vsyncpa [#allocation3], 0
    // Predicated region
    $region2: #{tpu_custom_call.1} parent=1 // pred_check
      _
    $region3: #{tpu_custom_call.1} parent=1 // pred_check_branch
      %12 = sbr.rel (0) target = $region5
    $region4: #{tpu_custom_call.1} parent=1 // pred_region
      _
    $region5: #{tpu_custom_call.1} parent=1 // pred_fallthru
      _
    // Predicated region
    $region6: #{tpu_custom_call.1} parent=1 // pred_check
      _
    $region7: #{tpu_custom_call.1} parent=1 // pred_check_branch
      %14 = sbr.rel (0) target = $region9
    $region8: #{tpu_custom_call.1} parent=1 // pred_region
      _
    $region9: #{tpu_custom_call.1} parent=1 // pred_fallthru
      _
    // Predicated region
    $region10: #{tpu_custom_call.1} parent=1 // pred_check
      _
    $region11: #{tpu_custom_call.1} parent=1 // pred_check_branch
      %16 = sbr.rel (0) target = $region13
    $region12: #{tpu_custom_call.1} parent=1 // pred_region
      _
    $region13: #{tpu_custom_call.1} parent=1 // pred_fallthru
      _
    // Predicated region
    $region14: #{tpu_custom_call.1} parent=1 // pred_check
      _
    $region15: #{tpu_custom_call.1} parent=1 // pred_check_branch
      %18 = sbr.rel (0) target = $region17
    $region16: #{tpu_custom_call.1} parent=1 // pred_region
      _
    $region17: #{tpu_custom_call.1} parent=1 // pred_fallthru
      _
    // Predicated region
    $region18: #{tpu_custom_call.1} parent=1 // pred_check
      _
    $region19: #{tpu_custom_call.1} parent=1 // pred_check_branch
      %20 = sbr.rel (0) target = $region21
    $region20: #{tpu_custom_call.1} parent=1 // pred_region
      _
    $region21: #{tpu_custom_call.1} parent=1 // pred_fallthru
      _
    %v21 = vld [vmem:[%s0] sm:$0xff]
    %v22 = vld [vmem:[%s0 + $0x8] sm:$0xff]
    %v23 = vld [vmem:[%s1] sm:$0xff]
    %v24 = vld [vmem:[%s1 + $0x8] sm:$0xff]
    %v25 = vld [vmem:[%s1 + $0x10] sm:$0xff]
    %v26 = vld [vmem:[%s1 + $0x18] sm:$0xff]
    %v27 = vld [vmem:[%s1 + $0x20] sm:$0xff]
    %v28 = vld [vmem:[%s1 + $0x28] sm:$0xff]
    %v29 = vld [vmem:[%s1 + $0x30] sm:$0xff]
    %v30 = vld [vmem:[%s1 + $0x38] sm:$0xff]
    %v31 = vld [vmem:[%s1 + $0x40] sm:$0xff]
    %v32 = vld [vmem:[%s1 + $0x48] sm:$0xff]
    %v33 = vld [vmem:[%s1 + $0x50] sm:$0xff]
    %v34 = vld [vmem:[%s1 + $0x58] sm:$0xff]
    %v35 = vld [vmem:[%s1 + $0x60] sm:$0xff]
    %v36 = vld [vmem:[%s1 + $0x68] sm:$0xff]
    %v37 = vld [vmem:[%s1 + $0x70] sm:$0xff]
    %v38 = vld [vmem:[%s1 + $0x78] sm:$0xff]
    %v39 = vld [vmem:[%s1 + $0x80] sm:$0xff]
    %v40 = vld [vmem:[%s1 + $0x88] sm:$0xff]
    %v41 = vld [vmem:[%s1 + $0x90] sm:$0xff]
    %v42 = vld [vmem:[%s1 + $0x98] sm:$0xff]
    %v43 = vld [vmem:[%s1 + $0xa0] sm:$0xff]
    %v44 = vld [vmem:[%s1 + $0xa8] sm:$0xff]
    %v45 = vld [vmem:[%s1 + $0xb0] sm:$0xff]
    %v46 = vld [vmem:[%s1 + $0xb8] sm:$0xff]
    %v47 = vld [vmem:[%s1 + $0xc0] sm:$0xff]
    %v48 = vld [vmem:[%s1 + $0xc8] sm:$0xff]
    %v49 = vld [vmem:[%s1 + $0xd0] sm:$0xff]
    %v50 = vld [vmem:[%s1 + $0xd8] sm:$0xff]
    %v51 = vld [vmem:[%s1 + $0xe0] sm:$0xff]
    %v52 = vld [vmem:[%s1 + $0xe8] sm:$0xff]
    %v53 = vld [vmem:[%s1 + $0xf0] sm:$0xff]
    %v54 = vld [vmem:[%s1 + $0xf8] sm:$0xff]
    %v55 = vld [vmem:[%s2] sm:$0x1]
    %v56 = vld [vmem:[%s2 + $0x1] sm:$0x1]
    %v57 = vld [vmem:[%s2 + $0x2] sm:$0x1]
    %v58 = vld [vmem:[%s2 + $0x3] sm:$0x1]
    %v59 = vld [vmem:[%s2 + $0x4] sm:$0x1]
    %v60 = vld [vmem:[%s2 + $0x5] sm:$0x1]
    %v61 = vld [vmem:[%s2 + $0x6] sm:$0x1]
    %v62 = vld [vmem:[%s2 + $0x7] sm:$0x1]
    %v71 = vperm.slane %v55, 0
    %v72 = vperm.slane %v56, 0
    %v73 = vperm.slane %v57, 0
    %v74 = vperm.slane %v58, 0
    %v75 = vperm.slane %v59, 0
    %v76 = vperm.slane %v60, 0
    %v77 = vperm.slane %v61, 0
    %v78 = vperm.slane %v62, 0
    %vm87 = vcmask 261120
    %v89 = vsel %vm87, %v21, 0
    %91 = vmatpush.msra.mxu0 0.0
    %92 = vmatpush.msra.mxu0 0.0
    %93 = vmatpush.msra.mxu0 0.0
    %94 = vmatpush.msra.mxu0 0.0
    %95 = vmatpush.msra.mxu0 0.0
    %96 = vmatpush.msra.mxu0 0.0
    %97 = vmatpush.msra.mxu0 0.0
    %98 = vmatpush.msra.mxu0 0.0
    %99 = vmatpush.msra.mxu0 0.0
    %100 = vmatpush.msra.mxu0 0.0
    %101 = vmatpush.msra.mxu0 0.0
    %102 = vmatpush.msra.mxu0 0.0
    %103 = vmatpush.msra.mxu0 %v26
    %104 = vmatpush.msra.mxu0 %v25
    %105 = vmatpush.msra.mxu0 %v24
    %106 = vmatpush.msra.mxu0 %v23
    %107 = vmatmul.f32.gmra.mxu0 %v89
    %v108 = vpop.f32.mrf.mxu0
    %v109 = vadd.f32 %v71, %v108
    %110 = vdwg.mxu0
    %111 = vmatpush.msra.mxu0 0.0
    %112 = vmatpush.msra.mxu0 0.0
    %113 = vmatpush.msra.mxu0 0.0
    %114 = vmatpush.msra.mxu0 0.0
    %115 = vmatpush.msra.mxu0 0.0
    %116 = vmatpush.msra.mxu0 0.0
    %117 = vmatpush.msra.mxu0 0.0
    %118 = vmatpush.msra.mxu0 0.0
    %119 = vmatpush.msra.mxu0 0.0
    %120 = vmatpush.msra.mxu0 0.0
    %121 = vmatpush.msra.mxu0 0.0
    %122 = vmatpush.msra.mxu0 0.0
    %123 = vmatpush.msra.mxu0 %v30
    %124 = vmatpush.msra.mxu0 %v29
    %125 = vmatpush.msra.mxu0 %v28
    %126 = vmatpush.msra.mxu0 %v27
    %127 = vmatmul.f32.gmra.mxu0 %v89
    %v128 = vpop.f32.mrf.mxu0
    %v129 = vadd.f32 %v72, %v128
    %130 = vdwg.mxu0
    %131 = vmatpush.msra.mxu0 0.0
    %132 = vmatpush.msra.mxu0 0.0
    %133 = vmatpush.msra.mxu0 0.0
    %134 = vmatpush.msra.mxu0 0.0
    %135 = vmatpush.msra.mxu0 0.0
    %136 = vmatpush.msra.mxu0 0.0
    %137 = vmatpush.msra.mxu0 0.0
    %138 = vmatpush.msra.mxu0 0.0
    %139 = vmatpush.msra.mxu0 0.0
    %140 = vmatpush.msra.mxu0 0.0
    %141 = vmatpush.msra.mxu0 0.0
    %142 = vmatpush.msra.mxu0 0.0
    %143 = vmatpush.msra.mxu0 %v34
    %144 = vmatpush.msra.mxu0 %v33
    %145 = vmatpush.msra.mxu0 %v32
    %146 = vmatpush.msra.mxu0 %v31
    %147 = vmatmul.f32.gmra.mxu0 %v89
    %v148 = vpop.f32.mrf.mxu0
    %v149 = vadd.f32 %v73, %v148
    %150 = vdwg.mxu0
    %151 = vmatpush.msra.mxu0 0.0
    %152 = vmatpush.msra.mxu0 0.0
    %153 = vmatpush.msra.mxu0 0.0
    %154 = vmatpush.msra.mxu0 0.0
    %155 = vmatpush.msra.mxu0 0.0
    %156 = vmatpush.msra.mxu0 0.0
    %157 = vmatpush.msra.mxu0 0.0
    %158 = vmatpush.msra.mxu0 0.0
    %159 = vmatpush.msra.mxu0 0.0
    %160 = vmatpush.msra.mxu0 0.0
    %161 = vmatpush.msra.mxu0 0.0
    %162 = vmatpush.msra.mxu0 0.0
    %163 = vmatpush.msra.mxu0 %v38
    %164 = vmatpush.msra.mxu0 %v37
    %165 = vmatpush.msra.mxu0 %v36
    %166 = vmatpush.msra.mxu0 %v35
    %167 = vmatmul.f32.gmra.mxu0 %v89
    %v168 = vpop.f32.mrf.mxu0
    %v169 = vadd.f32 %v74, %v168
    %170 = vdwg.mxu0
    %v172 = vsel %vm87, %v22, 0
    %174 = vmatpush.msra.mxu0 0.0
    %175 = vmatpush.msra.mxu0 0.0
    %176 = vmatpush.msra.mxu0 0.0
    %177 = vmatpush.msra.mxu0 0.0
    %178 = vmatpush.msra.mxu0 0.0
    %179 = vmatpush.msra.mxu0 0.0
    %180 = vmatpush.msra.mxu0 0.0
    %181 = vmatpush.msra.mxu0 0.0
    %182 = vmatpush.msra.mxu0 0.0
    %183 = vmatpush.msra.mxu0 0.0
    %184 = vmatpush.msra.mxu0 0.0
    %185 = vmatpush.msra.mxu0 0.0
    %186 = vmatpush.msra.mxu0 %v42
    %187 = vmatpush.msra.mxu0 %v41
    %188 = vmatpush.msra.mxu0 %v40
    %189 = vmatpush.msra.mxu0 %v39
    %190 = vmatmul.f32.gmra.mxu0 %v172
    %v191 = vpop.f32.mrf.mxu0
    %v192 = vadd.f32 %v75, %v191
    %193 = vdwg.mxu0
    %194 = vmatpush.msra.mxu0 0.0
    %195 = vmatpush.msra.mxu0 0.0
    %196 = vmatpush.msra.mxu0 0.0
    %197 = vmatpush.msra.mxu0 0.0
    %198 = vmatpush.msra.mxu0 0.0
    %199 = vmatpush.msra.mxu0 0.0
    %200 = vmatpush.msra.mxu0 0.0
    %201 = vmatpush.msra.mxu0 0.0
    %202 = vmatpush.msra.mxu0 0.0
    %203 = vmatpush.msra.mxu0 0.0
    %204 = vmatpush.msra.mxu0 0.0
    %205 = vmatpush.msra.mxu0 0.0
    %206 = vmatpush.msra.mxu0 %v46
    %207 = vmatpush.msra.mxu0 %v45
    %208 = vmatpush.msra.mxu0 %v44
    %209 = vmatpush.msra.mxu0 %v43
    %210 = vmatmul.f32.gmra.mxu0 %v172
    %v211 = vpop.f32.mrf.mxu0
    %v212 = vadd.f32 %v76, %v211
    %213 = vdwg.mxu0
    %214 = vmatpush.msra.mxu0 0.0
    %215 = vmatpush.msra.mxu0 0.0
    %216 = vmatpush.msra.mxu0 0.0
    %217 = vmatpush.msra.mxu0 0.0
    %218 = vmatpush.msra.mxu0 0.0
    %219 = vmatpush.msra.mxu0 0.0
    %220 = vmatpush.msra.mxu0 0.0
    %221 = vmatpush.msra.mxu0 0.0
    %222 = vmatpush.msra.mxu0 0.0
    %223 = vmatpush.msra.mxu0 0.0
    %224 = vmatpush.msra.mxu0 0.0
    %225 = vmatpush.msra.mxu0 0.0
    %226 = vmatpush.msra.mxu0 %v50
    %227 = vmatpush.msra.mxu0 %v49
    %228 = vmatpush.msra.mxu0 %v48
    %229 = vmatpush.msra.mxu0 %v47
    %230 = vmatmul.f32.gmra.mxu0 %v172
    %v231 = vpop.f32.mrf.mxu0
    %v232 = vadd.f32 %v77, %v231
    %233 = vdwg.mxu0
    %234 = vmatpush.msra.mxu0 0.0
    %235 = vmatpush.msra.mxu0 0.0
    %236 = vmatpush.msra.mxu0 0.0
    %237 = vmatpush.msra.mxu0 0.0
    %238 = vmatpush.msra.mxu0 0.0
    %239 = vmatpush.msra.mxu0 0.0
    %240 = vmatpush.msra.mxu0 0.0
    %241 = vmatpush.msra.mxu0 0.0
    %242 = vmatpush.msra.mxu0 0.0
    %243 = vmatpush.msra.mxu0 0.0
    %244 = vmatpush.msra.mxu0 0.0
    %245 = vmatpush.msra.mxu0 0.0
    %246 = vmatpush.msra.mxu0 %v54
    %247 = vmatpush.msra.mxu0 %v53
    %248 = vmatpush.msra.mxu0 %v52
    %249 = vmatpush.msra.mxu0 %v51
    %250 = vmatmul.f32.gmra.mxu0 %v172
    %v251 = vpop.f32.mrf.mxu0
    %v252 = vadd.f32 %v78, %v251
    %253 = vdwg.mxu0
    %255 = vrot.lane.b32.xlu0 %v109, 120
    %v256 = vpop.permute.xlu0 %255
    %vm257 = vcmask 64512
    %v258 = vsel %vm257, %v109, 0
    %v260 = vsel %vm257, %v256, 0
    %262 = vmatpush.xpose.msra.mxu0 0.0
    %263 = vmatpush.xpose.msra.mxu0 0.0
    %264 = vmatpush.xpose.msra.mxu0 0.0
    %265 = vmatpush.xpose.msra.mxu0 0.0
    %266 = vmatpush.xpose.msra.mxu0 0.0
    %267 = vmatpush.xpose.msra.mxu0 0.0
    %268 = vmatpush.xpose.msra.mxu0 0.0
    %269 = vmatpush.xpose.msra.mxu0 0.0
    %270 = vmatpush.xpose.msra.mxu0 0.0
    %271 = vmatpush.xpose.msra.mxu0 0.0
    %272 = vmatpush.xpose.msra.mxu0 0.0
    %273 = vmatpush.xpose.msra.mxu0 0.0
    %274 = vmatpush.xpose.msra.mxu0 0.0
    %275 = vmatpush.xpose.msra.mxu0 0.0
    %276 = vmatpush.xpose.msra.mxu0 0.0
    %277 = vmatpush.xpose.msra.mxu0 %v260
    %278 = vmatmul.f32.gmra.mxu0 %v258
    %v279 = vpop.f32.mrf.mxu0
    %v280 = vadd.f32 0.0, %v279
    %281 = vdwg.mxu0
    %283 = vrot.lane.b32.xlu0 %v129, 120
    %v284 = vpop.permute.xlu0 %283
    %v285 = vsel %vm257, %v129, 0
    %v287 = vsel %vm257, %v284, 0
    %289 = vmatpush.xpose.msra.mxu0 0.0
    %290 = vmatpush.xpose.msra.mxu0 0.0
    %291 = vmatpush.xpose.msra.mxu0 0.0
    %292 = vmatpush.xpose.msra.mxu0 0.0
    %293 = vmatpush.xpose.msra.mxu0 0.0
    %294 = vmatpush.xpose.msra.mxu0 0.0
    %295 = vmatpush.xpose.msra.mxu0 0.0
    %296 = vmatpush.xpose.msra.mxu0 0.0
    %297 = vmatpush.xpose.msra.mxu0 0.0
    %298 = vmatpush.xpose.msra.mxu0 0.0
    %299 = vmatpush.xpose.msra.mxu0 0.0
    %300 = vmatpush.xpose.msra.mxu0 0.0
    %301 = vmatpush.xpose.msra.mxu0 0.0
    %302 = vmatpush.xpose.msra.mxu0 0.0
    %303 = vmatpush.xpose.msra.mxu0 0.0
    %304 = vmatpush.xpose.msra.mxu0 %v287
    %305 = vmatmul.f32.gmra.mxu0 %v285
    %v306 = vpop.f32.mrf.mxu0
    %v307 = vadd.f32 0.0, %v306
    %308 = vdwg.mxu0
    %310 = vrot.lane.b32.xlu0 %v149, 120
    %v311 = vpop.permute.xlu0 %310
    %v312 = vsel %vm257, %v149, 0
    %v314 = vsel %vm257, %v311, 0
    %316 = vmatpush.xpose.msra.mxu0 0.0
    %317 = vmatpush.xpose.msra.mxu0 0.0
    %318 = vmatpush.xpose.msra.mxu0 0.0
    %319 = vmatpush.xpose.msra.mxu0 0.0
    %320 = vmatpush.xpose.msra.mxu0 0.0
    %321 = vmatpush.xpose.msra.mxu0 0.0
    %322 = vmatpush.xpose.msra.mxu0 0.0
    %323 = vmatpush.xpose.msra.mxu0 0.0
    %324 = vmatpush.xpose.msra.mxu0 0.0
    %325 = vmatpush.xpose.msra.mxu0 0.0
    %326 = vmatpush.xpose.msra.mxu0 0.0
    %327 = vmatpush.xpose.msra.mxu0 0.0
    %328 = vmatpush.xpose.msra.mxu0 0.0
    %329 = vmatpush.xpose.msra.mxu0 0.0
    %330 = vmatpush.xpose.msra.mxu0 0.0
    %331 = vmatpush.xpose.msra.mxu0 %v314
    %332 = vmatmul.f32.gmra.mxu0 %v312
    %v333 = vpop.f32.mrf.mxu0
    %v334 = vadd.f32 0.0, %v333
    %335 = vdwg.mxu0
    %337 = vrot.lane.b32.xlu0 %v169, 120
    %v338 = vpop.permute.xlu0 %337
    %v339 = vsel %vm257, %v169, 0
    %v341 = vsel %vm257, %v338, 0
    %343 = vmatpush.xpose.msra.mxu0 0.0
    %344 = vmatpush.xpose.msra.mxu0 0.0
    %345 = vmatpush.xpose.msra.mxu0 0.0
    %346 = vmatpush.xpose.msra.mxu0 0.0
    %347 = vmatpush.xpose.msra.mxu0 0.0
    %348 = vmatpush.xpose.msra.mxu0 0.0
    %349 = vmatpush.xpose.msra.mxu0 0.0
    %350 = vmatpush.xpose.msra.mxu0 0.0
    %351 = vmatpush.xpose.msra.mxu0 0.0
    %352 = vmatpush.xpose.msra.mxu0 0.0
    %353 = vmatpush.xpose.msra.mxu0 0.0
    %354 = vmatpush.xpose.msra.mxu0 0.0
    %355 = vmatpush.xpose.msra.mxu0 0.0
    %356 = vmatpush.xpose.msra.mxu0 0.0
    %357 = vmatpush.xpose.msra.mxu0 0.0
    %358 = vmatpush.xpose.msra.mxu0 %v341
    %359 = vmatmul.f32.gmra.mxu0 %v339
    %v360 = vpop.f32.mrf.mxu0
    %v361 = vadd.f32 0.0, %v360
    %362 = vdwg.mxu0
    %364 = vrot.lane.b32.xlu0 %v192, 120
    %v365 = vpop.permute.xlu0 %364
    %v366 = vsel %vm257, %v192, 0
    %v368 = vsel %vm257, %v365, 0
    %370 = vmatpush.xpose.msra.mxu0 0.0
    %371 = vmatpush.xpose.msra.mxu0 0.0
    %372 = vmatpush.xpose.msra.mxu0 0.0
    %373 = vmatpush.xpose.msra.mxu0 0.0
    %374 = vmatpush.xpose.msra.mxu0 0.0
    %375 = vmatpush.xpose.msra.mxu0 0.0
    %376 = vmatpush.xpose.msra.mxu0 0.0
    %377 = vmatpush.xpose.msra.mxu0 0.0
    %378 = vmatpush.xpose.msra.mxu0 0.0
    %379 = vmatpush.xpose.msra.mxu0 0.0
    %380 = vmatpush.xpose.msra.mxu0 0.0
    %381 = vmatpush.xpose.msra.mxu0 0.0
    %382 = vmatpush.xpose.msra.mxu0 0.0
    %383 = vmatpush.xpose.msra.mxu0 0.0
    %384 = vmatpush.xpose.msra.mxu0 0.0
    %385 = vmatpush.xpose.msra.mxu0 %v368
    %386 = vmatmul.f32.gmra.mxu0 %v366
    %v387 = vpop.f32.mrf.mxu0
    %v388 = vadd.f32 0.0, %v387
    %389 = vdwg.mxu0
    %391 = vrot.lane.b32.xlu0 %v212, 120
    %v392 = vpop.permute.xlu0 %391
    %v393 = vsel %vm257, %v212, 0
    %v395 = vsel %vm257, %v392, 0
    %397 = vmatpush.xpose.msra.mxu0 0.0
    %398 = vmatpush.xpose.msra.mxu0 0.0
    %399 = vmatpush.xpose.msra.mxu0 0.0
    %400 = vmatpush.xpose.msra.mxu0 0.0
    %401 = vmatpush.xpose.msra.mxu0 0.0
    %402 = vmatpush.xpose.msra.mxu0 0.0
    %403 = vmatpush.xpose.msra.mxu0 0.0
    %404 = vmatpush.xpose.msra.mxu0 0.0
    %405 = vmatpush.xpose.msra.mxu0 0.0
    %406 = vmatpush.xpose.msra.mxu0 0.0
    %407 = vmatpush.xpose.msra.mxu0 0.0
    %408 = vmatpush.xpose.msra.mxu0 0.0
    %409 = vmatpush.xpose.msra.mxu0 0.0
    %410 = vmatpush.xpose.msra.mxu0 0.0
    %411 = vmatpush.xpose.msra.mxu0 0.0
    %412 = vmatpush.xpose.msra.mxu0 %v395
    %413 = vmatmul.f32.gmra.mxu0 %v393
    %v414 = vpop.f32.mrf.mxu0
    %v415 = vadd.f32 0.0, %v414
    %416 = vdwg.mxu0
    %418 = vrot.lane.b32.xlu0 %v232, 120
    %v419 = vpop.permute.xlu0 %418
    %v420 = vsel %vm257, %v232, 0
    %v422 = vsel %vm257, %v419, 0
    %424 = vmatpush.xpose.msra.mxu0 0.0
    %425 = vmatpush.xpose.msra.mxu0 0.0
    %426 = vmatpush.xpose.msra.mxu0 0.0
    %427 = vmatpush.xpose.msra.mxu0 0.0
    %428 = vmatpush.xpose.msra.mxu0 0.0
    %429 = vmatpush.xpose.msra.mxu0 0.0
    %430 = vmatpush.xpose.msra.mxu0 0.0
    %431 = vmatpush.xpose.msra.mxu0 0.0
    %432 = vmatpush.xpose.msra.mxu0 0.0
    %433 = vmatpush.xpose.msra.mxu0 0.0
    %434 = vmatpush.xpose.msra.mxu0 0.0
    %435 = vmatpush.xpose.msra.mxu0 0.0
    %436 = vmatpush.xpose.msra.mxu0 0.0
    %437 = vmatpush.xpose.msra.mxu0 0.0
    %438 = vmatpush.xpose.msra.mxu0 0.0
    %439 = vmatpush.xpose.msra.mxu0 %v422
    %440 = vmatmul.f32.gmra.mxu0 %v420
    %v441 = vpop.f32.mrf.mxu0
    %v442 = vadd.f32 0.0, %v441
    %443 = vdwg.mxu0
    %445 = vrot.lane.b32.xlu0 %v252, 120
    %v446 = vpop.permute.xlu0 %445
    %v447 = vsel %vm257, %v252, 0
    %v449 = vsel %vm257, %v446, 0
    %451 = vmatpush.xpose.msra.mxu0 0.0
    %452 = vmatpush.xpose.msra.mxu0 0.0
    %453 = vmatpush.xpose.msra.mxu0 0.0
    %454 = vmatpush.xpose.msra.mxu0 0.0
    %455 = vmatpush.xpose.msra.mxu0 0.0
    %456 = vmatpush.xpose.msra.mxu0 0.0
    %457 = vmatpush.xpose.msra.mxu0 0.0
    %458 = vmatpush.xpose.msra.mxu0 0.0
    %459 = vmatpush.xpose.msra.mxu0 0.0
    %460 = vmatpush.xpose.msra.mxu0 0.0
    %461 = vmatpush.xpose.msra.mxu0 0.0
    %462 = vmatpush.xpose.msra.mxu0 0.0
    %463 = vmatpush.xpose.msra.mxu0 0.0
    %464 = vmatpush.xpose.msra.mxu0 0.0
    %465 = vmatpush.xpose.msra.mxu0 0.0
    %466 = vmatpush.xpose.msra.mxu0 %v449
    %467 = vmatmul.f32.gmra.mxu0 %v447
    %v468 = vpop.f32.mrf.mxu0
    %v469 = vadd.f32 0.0, %v468
    %470 = vdwg.mxu0
    %v471 = vsel %vm257, %v280, -inf
    %472 = vmax.xlane.f32.xlu0 %v471
    %v473 = vpop.xlane.xlu0 %472
    %v474 = vsel %vm257, %v307, -inf
    %475 = vmax.xlane.f32.xlu0 %v474
    %v476 = vpop.xlane.xlu0 %475
    %v477 = vsel %vm257, %v334, -inf
    %478 = vmax.xlane.f32.xlu0 %v477
    %v479 = vpop.xlane.xlu0 %478
    %v480 = vsel %vm257, %v361, -inf
    %481 = vmax.xlane.f32.xlu0 %v480
    %v482 = vpop.xlane.xlu0 %481
    %v483 = vsel %vm257, %v388, -inf
    %484 = vmax.xlane.f32.xlu0 %v483
    %v485 = vpop.xlane.xlu0 %484
    %v486 = vsel %vm257, %v415, -inf
    %487 = vmax.xlane.f32.xlu0 %v486
    %v488 = vpop.xlane.xlu0 %487
    %v489 = vsel %vm257, %v442, -inf
    %490 = vmax.xlane.f32.xlu0 %v489
    %v491 = vpop.xlane.xlu0 %490
    %v492 = vsel %vm257, %v469, -inf
    %493 = vmax.xlane.f32.xlu0 %v492
    %v494 = vpop.xlane.xlu0 %493
    %v495 = vsub.f32 %v280, %v473
    %v496 = vsub.f32 %v307, %v476
    %v497 = vsub.f32 %v334, %v479
    %v498 = vsub.f32 %v361, %v482
    %v499 = vsub.f32 %v388, %v485
    %v500 = vsub.f32 %v415, %v488
    %v501 = vsub.f32 %v442, %v491
    %v502 = vsub.f32 %v469, %v494
    %v503 = vmul.f32 %v495, 1.442695
    %v504 = vpow.pop %v503
    %v505 = vmul.f32 %v496, 1.442695
    %v506 = vpow.pop %v505
    %v507 = vmul.f32 %v497, 1.442695
    %v508 = vpow.pop %v507
    %v509 = vmul.f32 %v498, 1.442695
    %v510 = vpow.pop %v509
    %v511 = vmul.f32 %v499, 1.442695
    %v512 = vpow.pop %v511
    %v513 = vmul.f32 %v500, 1.442695
    %v514 = vpow.pop %v513
    %v515 = vmul.f32 %v501, 1.442695
    %v516 = vpow.pop %v515
    %v517 = vmul.f32 %v502, 1.442695
    %v518 = vpow.pop %v517
    %v519 = vsel %vm257, %v504, 0.0
    %520 = vadd.xlane.f32.xlu0 %v519
    %v521 = vpop.xlane.xlu0 %520
    %v522 = vsel %vm257, %v506, 0.0
    %523 = vadd.xlane.f32.xlu0 %v522
    %v524 = vpop.xlane.xlu0 %523
    %v525 = vsel %vm257, %v508, 0.0
    %526 = vadd.xlane.f32.xlu0 %v525
    %v527 = vpop.xlane.xlu0 %526
    %v528 = vsel %vm257, %v510, 0.0
    %529 = vadd.xlane.f32.xlu0 %v528
    %v530 = vpop.xlane.xlu0 %529
    %v531 = vsel %vm257, %v512, 0.0
    %532 = vadd.xlane.f32.xlu0 %v531
    %v533 = vpop.xlane.xlu0 %532
    %v534 = vsel %vm257, %v514, 0.0
    %535 = vadd.xlane.f32.xlu0 %v534
    %v536 = vpop.xlane.xlu0 %535
    %v537 = vsel %vm257, %v516, 0.0
    %538 = vadd.xlane.f32.xlu0 %v537
    %v539 = vpop.xlane.xlu0 %538
    %v540 = vsel %vm257, %v518, 0.0
    %541 = vadd.xlane.f32.xlu0 %v540
    %v542 = vpop.xlane.xlu0 %541
    %v543 = vrcp.pop %v521
    %v544 = vrcp.pop %v524
    %v545 = vrcp.pop %v527
    %v546 = vrcp.pop %v530
    %v547 = vrcp.pop %v533
    %v548 = vrcp.pop %v536
    %v549 = vrcp.pop %v539
    %v550 = vrcp.pop %v542
    %v551 = vmul.f32 %v504, %v543
    %v552 = vmul.f32 %v506, %v544
    %v553 = vmul.f32 %v508, %v545
    %v554 = vmul.f32 %v510, %v546
    %v555 = vmul.f32 %v512, %v547
    %v556 = vmul.f32 %v514, %v548
    %v557 = vmul.f32 %v516, %v549
    %v558 = vmul.f32 %v518, %v550
    %559 = vrot.lane.b32.xlu0 %v109, 112
    %v560 = vpop.permute.xlu0 %559
    %v563 = vsel %vm257, %v551, 0
    %565 = vmatpush.msra.mxu0 0.0
    %566 = vmatpush.msra.mxu0 0.0
    %567 = vmatpush.msra.mxu0 0.0
    %568 = vmatpush.msra.mxu0 0.0
    %569 = vmatpush.msra.mxu0 0.0
    %570 = vmatpush.msra.mxu0 0.0
    %571 = vmatpush.msra.mxu0 0.0
    %572 = vmatpush.msra.mxu0 0.0
    %573 = vmatpush.msra.mxu0 0.0
    %574 = vmatpush.msra.mxu0 0.0
    %575 = vmatpush.msra.mxu0 0.0
    %576 = vmatpush.msra.mxu0 0.0
    %577 = vmatpush.msra.mxu0 0.0
    %578 = vmatpush.msra.mxu0 0.0
    %579 = vmatpush.msra.mxu0 0.0
    %580 = vmatpush.msra.mxu0 %v560
    %581 = vmatmul.f32.gmra.mxu0 %v563
    %v582 = vpop.f32.mrf.mxu0
    %v583 = vadd.f32 0.0, %v582
    %584 = vdwg.mxu0
    %585 = vrot.lane.b32.xlu0 %v129, 112
    %v586 = vpop.permute.xlu0 %585
    %v589 = vsel %vm257, %v552, 0
    %591 = vmatpush.msra.mxu0 0.0
    %592 = vmatpush.msra.mxu0 0.0
    %593 = vmatpush.msra.mxu0 0.0
    %594 = vmatpush.msra.mxu0 0.0
    %595 = vmatpush.msra.mxu0 0.0
    %596 = vmatpush.msra.mxu0 0.0
    %597 = vmatpush.msra.mxu0 0.0
    %598 = vmatpush.msra.mxu0 0.0
    %599 = vmatpush.msra.mxu0 0.0
    %600 = vmatpush.msra.mxu0 0.0
    %601 = vmatpush.msra.mxu0 0.0
    %602 = vmatpush.msra.mxu0 0.0
    %603 = vmatpush.msra.mxu0 0.0
    %604 = vmatpush.msra.mxu0 0.0
    %605 = vmatpush.msra.mxu0 0.0
    %606 = vmatpush.msra.mxu0 %v586
    %607 = vmatmul.f32.gmra.mxu0 %v589
    %v608 = vpop.f32.mrf.mxu0
    %v609 = vadd.f32 0.0, %v608
    %610 = vdwg.mxu0
    %611 = vrot.lane.b32.xlu0 %v149, 112
    %v612 = vpop.permute.xlu0 %611
    %v615 = vsel %vm257, %v553, 0
    %617 = vmatpush.msra.mxu0 0.0
    %618 = vmatpush.msra.mxu0 0.0
    %619 = vmatpush.msra.mxu0 0.0
    %620 = vmatpush.msra.mxu0 0.0
    %621 = vmatpush.msra.mxu0 0.0
    %622 = vmatpush.msra.mxu0 0.0
    %623 = vmatpush.msra.mxu0 0.0
    %624 = vmatpush.msra.mxu0 0.0
    %625 = vmatpush.msra.mxu0 0.0
    %626 = vmatpush.msra.mxu0 0.0
    %627 = vmatpush.msra.mxu0 0.0
    %628 = vmatpush.msra.mxu0 0.0
    %629 = vmatpush.msra.mxu0 0.0
    %630 = vmatpush.msra.mxu0 0.0
    %631 = vmatpush.msra.mxu0 0.0
    %632 = vmatpush.msra.mxu0 %v612
    %633 = vmatmul.f32.gmra.mxu0 %v615
    %v634 = vpop.f32.mrf.mxu0
    %v635 = vadd.f32 0.0, %v634
    %636 = vdwg.mxu0
    %637 = vrot.lane.b32.xlu0 %v169, 112
    %v638 = vpop.permute.xlu0 %637
    %v641 = vsel %vm257, %v554, 0
    %643 = vmatpush.msra.mxu0 0.0
    %644 = vmatpush.msra.mxu0 0.0
    %645 = vmatpush.msra.mxu0 0.0
    %646 = vmatpush.msra.mxu0 0.0
    %647 = vmatpush.msra.mxu0 0.0
    %648 = vmatpush.msra.mxu0 0.0
    %649 = vmatpush.msra.mxu0 0.0
    %650 = vmatpush.msra.mxu0 0.0
    %651 = vmatpush.msra.mxu0 0.0
    %652 = vmatpush.msra.mxu0 0.0
    %653 = vmatpush.msra.mxu0 0.0
    %654 = vmatpush.msra.mxu0 0.0
    %655 = vmatpush.msra.mxu0 0.0
    %656 = vmatpush.msra.mxu0 0.0
    %657 = vmatpush.msra.mxu0 0.0
    %658 = vmatpush.msra.mxu0 %v638
    %659 = vmatmul.f32.gmra.mxu0 %v641
    %v660 = vpop.f32.mrf.mxu0
    %v661 = vadd.f32 0.0, %v660
    %662 = vdwg.mxu0
    %663 = vrot.lane.b32.xlu0 %v192, 112
    %v664 = vpop.permute.xlu0 %663
    %v667 = vsel %vm257, %v555, 0
    %669 = vmatpush.msra.mxu0 0.0
    %670 = vmatpush.msra.mxu0 0.0
    %671 = vmatpush.msra.mxu0 0.0
    %672 = vmatpush.msra.mxu0 0.0
    %673 = vmatpush.msra.mxu0 0.0
    %674 = vmatpush.msra.mxu0 0.0
    %675 = vmatpush.msra.mxu0 0.0
    %676 = vmatpush.msra.mxu0 0.0
    %677 = vmatpush.msra.mxu0 0.0
    %678 = vmatpush.msra.mxu0 0.0
    %679 = vmatpush.msra.mxu0 0.0
    %680 = vmatpush.msra.mxu0 0.0
    %681 = vmatpush.msra.mxu0 0.0
    %682 = vmatpush.msra.mxu0 0.0
    %683 = vmatpush.msra.mxu0 0.0
    %684 = vmatpush.msra.mxu0 %v664
    %685 = vmatmul.f32.gmra.mxu0 %v667
    %v686 = vpop.f32.mrf.mxu0
    %v687 = vadd.f32 0.0, %v686
    %688 = vdwg.mxu0
    %689 = vrot.lane.b32.xlu0 %v212, 112
    %v690 = vpop.permute.xlu0 %689
    %v693 = vsel %vm257, %v556, 0
    %695 = vmatpush.msra.mxu0 0.0
    %696 = vmatpush.msra.mxu0 0.0
    %697 = vmatpush.msra.mxu0 0.0
    %698 = vmatpush.msra.mxu0 0.0
    %699 = vmatpush.msra.mxu0 0.0
    %700 = vmatpush.msra.mxu0 0.0
    %701 = vmatpush.msra.mxu0 0.0
    %702 = vmatpush.msra.mxu0 0.0
    %703 = vmatpush.msra.mxu0 0.0
    %704 = vmatpush.msra.mxu0 0.0
    %705 = vmatpush.msra.mxu0 0.0
    %706 = vmatpush.msra.mxu0 0.0
    %707 = vmatpush.msra.mxu0 0.0
    %708 = vmatpush.msra.mxu0 0.0
    %709 = vmatpush.msra.mxu0 0.0
    %710 = vmatpush.msra.mxu0 %v690
    %711 = vmatmul.f32.gmra.mxu0 %v693
    %v712 = vpop.f32.mrf.mxu0
    %v713 = vadd.f32 0.0, %v712
    %714 = vdwg.mxu0
    %715 = vrot.lane.b32.xlu0 %v232, 112
    %v716 = vpop.permute.xlu0 %715
    %v719 = vsel %vm257, %v557, 0
    %721 = vmatpush.msra.mxu0 0.0
    %722 = vmatpush.msra.mxu0 0.0
    %723 = vmatpush.msra.mxu0 0.0
    %724 = vmatpush.msra.mxu0 0.0
    %725 = vmatpush.msra.mxu0 0.0
    %726 = vmatpush.msra.mxu0 0.0
    %727 = vmatpush.msra.mxu0 0.0
    %728 = vmatpush.msra.mxu0 0.0
    %729 = vmatpush.msra.mxu0 0.0
    %730 = vmatpush.msra.mxu0 0.0
    %731 = vmatpush.msra.mxu0 0.0
    %732 = vmatpush.msra.mxu0 0.0
    %733 = vmatpush.msra.mxu0 0.0
    %734 = vmatpush.msra.mxu0 0.0
    %735 = vmatpush.msra.mxu0 0.0
    %736 = vmatpush.msra.mxu0 %v716
    %737 = vmatmul.f32.gmra.mxu0 %v719
    %v738 = vpop.f32.mrf.mxu0
    %v739 = vadd.f32 0.0, %v738
    %740 = vdwg.mxu0
    %741 = vrot.lane.b32.xlu0 %v252, 112
    %v742 = vpop.permute.xlu0 %741
    %v745 = vsel %vm257, %v558, 0
    %747 = vmatpush.msra.mxu0 0.0
    %748 = vmatpush.msra.mxu0 0.0
    %749 = vmatpush.msra.mxu0 0.0
    %750 = vmatpush.msra.mxu0 0.0
    %751 = vmatpush.msra.mxu0 0.0
    %752 = vmatpush.msra.mxu0 0.0
    %753 = vmatpush.msra.mxu0 0.0
    %754 = vmatpush.msra.mxu0 0.0
    %755 = vmatpush.msra.mxu0 0.0
    %756 = vmatpush.msra.mxu0 0.0
    %757 = vmatpush.msra.mxu0 0.0
    %758 = vmatpush.msra.mxu0 0.0
    %759 = vmatpush.msra.mxu0 0.0
    %760 = vmatpush.msra.mxu0 0.0
    %761 = vmatpush.msra.mxu0 0.0
    %762 = vmatpush.msra.mxu0 %v742
    %763 = vmatmul.f32.gmra.mxu0 %v745
    %v764 = vpop.f32.mrf.mxu0
    %v765 = vadd.f32 0.0, %v764
    %766 = vdwg.mxu0
    %v767 = vld [vmem:[%s3] sm:$0xff]
    %v768 = vld [vmem:[%s3 + $0x8] sm:$0xff]
    %v769 = vld [vmem:[%s3 + $0x10] sm:$0xff]
    %v770 = vld [vmem:[%s3 + $0x18] sm:$0xff]
    %v771 = vld [vmem:[%s3 + $0x20] sm:$0xff]
    %v772 = vld [vmem:[%s3 + $0x28] sm:$0xff]
    %v773 = vld [vmem:[%s3 + $0x30] sm:$0xff]
    %v774 = vld [vmem:[%s3 + $0x38] sm:$0xff]
    %v776 = vsel %vm257, %v583, 0
    %778 = vmatpush.msra.mxu0 0.0
    %779 = vmatpush.msra.mxu0 0.0
    %780 = vmatpush.msra.mxu0 0.0
    %781 = vmatpush.msra.mxu0 0.0
    %782 = vmatpush.msra.mxu0 0.0
    %783 = vmatpush.msra.mxu0 0.0
    %784 = vmatpush.msra.mxu0 0.0
    %785 = vmatpush.msra.mxu0 0.0
    %786 = vmatpush.msra.mxu0 0.0
    %787 = vmatpush.msra.mxu0 0.0
    %788 = vmatpush.msra.mxu0 0.0
    %789 = vmatpush.msra.mxu0 0.0
    %790 = vmatpush.msra.mxu0 0.0
    %791 = vmatpush.msra.mxu0 0.0
    %792 = vmatpush.msra.mxu0 0.0
    %793 = vmatpush.msra.mxu0 %v767
    %794 = vmatmul.f32.gmra.mxu0 %v776
    %v795 = vpop.f32.mrf.mxu0
    %v796 = vadd.f32 0.0, %v795
    %797 = vdwg.mxu0
    %v799 = vsel %vm257, %v609, 0
    %801 = vmatpush.msra.mxu0 0.0
    %802 = vmatpush.msra.mxu0 0.0
    %803 = vmatpush.msra.mxu0 0.0
    %804 = vmatpush.msra.mxu0 0.0
    %805 = vmatpush.msra.mxu0 0.0
    %806 = vmatpush.msra.mxu0 0.0
    %807 = vmatpush.msra.mxu0 0.0
    %808 = vmatpush.msra.mxu0 0.0
    %809 = vmatpush.msra.mxu0 0.0
    %810 = vmatpush.msra.mxu0 0.0
    %811 = vmatpush.msra.mxu0 0.0
    %812 = vmatpush.msra.mxu0 0.0
    %813 = vmatpush.msra.mxu0 0.0
    %814 = vmatpush.msra.mxu0 0.0
    %815 = vmatpush.msra.mxu0 0.0
    %816 = vmatpush.msra.mxu0 %v768
    %817 = vmatmul.f32.gmra.mxu0 %v799
    %v818 = vpop.f32.mrf.mxu0
    %v819 = vadd.f32 0.0, %v818
    %820 = vdwg.mxu0
    %v822 = vsel %vm257, %v635, 0
    %824 = vmatpush.msra.mxu0 0.0
    %825 = vmatpush.msra.mxu0 0.0
    %826 = vmatpush.msra.mxu0 0.0
    %827 = vmatpush.msra.mxu0 0.0
    %828 = vmatpush.msra.mxu0 0.0
    %829 = vmatpush.msra.mxu0 0.0
    %830 = vmatpush.msra.mxu0 0.0
    %831 = vmatpush.msra.mxu0 0.0
    %832 = vmatpush.msra.mxu0 0.0
    %833 = vmatpush.msra.mxu0 0.0
    %834 = vmatpush.msra.mxu0 0.0
    %835 = vmatpush.msra.mxu0 0.0
    %836 = vmatpush.msra.mxu0 0.0
    %837 = vmatpush.msra.mxu0 0.0
    %838 = vmatpush.msra.mxu0 0.0
    %839 = vmatpush.msra.mxu0 %v769
    %840 = vmatmul.f32.gmra.mxu0 %v822
    %v841 = vpop.f32.mrf.mxu0
    %v842 = vadd.f32 0.0, %v841
    %843 = vdwg.mxu0
    %v845 = vsel %vm257, %v661, 0
    %847 = vmatpush.msra.mxu0 0.0
    %848 = vmatpush.msra.mxu0 0.0
    %849 = vmatpush.msra.mxu0 0.0
    %850 = vmatpush.msra.mxu0 0.0
    %851 = vmatpush.msra.mxu0 0.0
    %852 = vmatpush.msra.mxu0 0.0
    %853 = vmatpush.msra.mxu0 0.0
    %854 = vmatpush.msra.mxu0 0.0
    %855 = vmatpush.msra.mxu0 0.0
    %856 = vmatpush.msra.mxu0 0.0
    %857 = vmatpush.msra.mxu0 0.0
    %858 = vmatpush.msra.mxu0 0.0
    %859 = vmatpush.msra.mxu0 0.0
    %860 = vmatpush.msra.mxu0 0.0
    %861 = vmatpush.msra.mxu0 0.0
    %862 = vmatpush.msra.mxu0 %v770
    %863 = vmatmul.f32.gmra.mxu0 %v845
    %v864 = vpop.f32.mrf.mxu0
    %v865 = vadd.f32 0.0, %v864
    %866 = vdwg.mxu0
    %v868 = vsel %vm257, %v687, 0
    %870 = vmatpush.msra.mxu0 0.0
    %871 = vmatpush.msra.mxu0 0.0
    %872 = vmatpush.msra.mxu0 0.0
    %873 = vmatpush.msra.mxu0 0.0
    %874 = vmatpush.msra.mxu0 0.0
    %875 = vmatpush.msra.mxu0 0.0
    %876 = vmatpush.msra.mxu0 0.0
    %877 = vmatpush.msra.mxu0 0.0
    %878 = vmatpush.msra.mxu0 0.0
    %879 = vmatpush.msra.mxu0 0.0
    %880 = vmatpush.msra.mxu0 0.0
    %881 = vmatpush.msra.mxu0 0.0
    %882 = vmatpush.msra.mxu0 0.0
    %883 = vmatpush.msra.mxu0 0.0
    %884 = vmatpush.msra.mxu0 0.0
    %885 = vmatpush.msra.mxu0 %v771
    %886 = vmatmul.f32.gmra.mxu0 %v868
    %v887 = vpop.f32.mrf.mxu0
    %v888 = vadd.f32 0.0, %v887
    %889 = vdwg.mxu0
    %v891 = vsel %vm257, %v713, 0
    %893 = vmatpush.msra.mxu0 0.0
    %894 = vmatpush.msra.mxu0 0.0
    %895 = vmatpush.msra.mxu0 0.0
    %896 = vmatpush.msra.mxu0 0.0
    %897 = vmatpush.msra.mxu0 0.0
    %898 = vmatpush.msra.mxu0 0.0
    %899 = vmatpush.msra.mxu0 0.0
    %900 = vmatpush.msra.mxu0 0.0
    %901 = vmatpush.msra.mxu0 0.0
    %902 = vmatpush.msra.mxu0 0.0
    %903 = vmatpush.msra.mxu0 0.0
    %904 = vmatpush.msra.mxu0 0.0
    %905 = vmatpush.msra.mxu0 0.0
    %906 = vmatpush.msra.mxu0 0.0
    %907 = vmatpush.msra.mxu0 0.0
    %908 = vmatpush.msra.mxu0 %v772
    %909 = vmatmul.f32.gmra.mxu0 %v891
    %v910 = vpop.f32.mrf.mxu0
    %v911 = vadd.f32 0.0, %v910
    %912 = vdwg.mxu0
    %v914 = vsel %vm257, %v739, 0
    %916 = vmatpush.msra.mxu0 0.0
    %917 = vmatpush.msra.mxu0 0.0
    %918 = vmatpush.msra.mxu0 0.0
    %919 = vmatpush.msra.mxu0 0.0
    %920 = vmatpush.msra.mxu0 0.0
    %921 = vmatpush.msra.mxu0 0.0
    %922 = vmatpush.msra.mxu0 0.0
    %923 = vmatpush.msra.mxu0 0.0
    %924 = vmatpush.msra.mxu0 0.0
    %925 = vmatpush.msra.mxu0 0.0
    %926 = vmatpush.msra.mxu0 0.0
    %927 = vmatpush.msra.mxu0 0.0
    %928 = vmatpush.msra.mxu0 0.0
    %929 = vmatpush.msra.mxu0 0.0
    %930 = vmatpush.msra.mxu0 0.0
    %931 = vmatpush.msra.mxu0 %v773
    %932 = vmatmul.f32.gmra.mxu0 %v914
    %v933 = vpop.f32.mrf.mxu0
    %v934 = vadd.f32 0.0, %v933
    %935 = vdwg.mxu0
    %v937 = vsel %vm257, %v765, 0
    %939 = vmatpush.msra.mxu0 0.0
    %940 = vmatpush.msra.mxu0 0.0
    %941 = vmatpush.msra.mxu0 0.0
    %942 = vmatpush.msra.mxu0 0.0
    %943 = vmatpush.msra.mxu0 0.0
    %944 = vmatpush.msra.mxu0 0.0
    %945 = vmatpush.msra.mxu0 0.0
    %946 = vmatpush.msra.mxu0 0.0
    %947 = vmatpush.msra.mxu0 0.0
    %948 = vmatpush.msra.mxu0 0.0
    %949 = vmatpush.msra.mxu0 0.0
    %950 = vmatpush.msra.mxu0 0.0
    %951 = vmatpush.msra.mxu0 0.0
    %952 = vmatpush.msra.mxu0 0.0
    %953 = vmatpush.msra.mxu0 0.0
    %954 = vmatpush.msra.mxu0 %v774
    %955 = vmatmul.f32.gmra.mxu0 %v937
    %v956 = vpop.f32.mrf.mxu0
    %v957 = vadd.f32 0.0, %v956
    %958 = vdwg.mxu0
    %v959 = vsel %vm87, %v796, 0.0
    %v960 = vsel %vm87, %v819, 0.0
    %v961 = vadd.f32 %v959, %v960
    %v962 = vsel %vm87, %v842, 0.0
    %v963 = vadd.f32 %v961, %v962
    %v964 = vsel %vm87, %v865, 0.0
    %v965 = vadd.f32 %v963, %v964
    %v966 = vsel %vm87, %v888, 0.0
    %v967 = vsel %vm87, %v911, 0.0
    %v968 = vadd.f32 %v966, %v967
    %v969 = vsel %vm87, %v934, 0.0
    %v970 = vadd.f32 %v968, %v969
    %v971 = vsel %vm87, %v957, 0.0
    %v972 = vadd.f32 %v970, %v971
    %v973 = vld [vmem:[%s4] sm:$0x1]
    %v975 = vperm.slane %v973, 0
    %v977 = vadd.f32 %v965, %v975
    %v978 = vadd.f32 %v972, %v975
    %979 = vst.msk [vmem:[#allocation2] sm:$0xff] %vm87, %v977
    %980 = vst.msk [vmem:[#allocation2 + $0x8] sm:$0xff] %vm87, %v978
    // Predicated region
    $region22: #{tpu_custom_call.1} parent=1 // pred_check
      _
    $region23: #{tpu_custom_call.1} parent=1 // pred_check_branch
      %982 = sbr.rel (0) target = $region25
    $region24: #{tpu_custom_call.1} parent=1 // pred_region
      %984 = vsyncadd [#allocation3], 0
      %s985 = sshll.u32 [#allocation2], 4
      %s986 = int_to_ptr.vmem [resolvable:$true] %s985
      %s987 = sshll.u32 %s5, 4
      %s988 = int_to_ptr.hbm [resolvable:$true] %s987
      %993 = dma.vmem_to_hbm [thread:$0]  %s986, 256, %s988, [#allocation3], 128, 128, 8
    $region25: #{tpu_custom_call.1} parent=1 // pred_fallthru
      _
    // Predicated region
    $region26: #{tpu_custom_call.1} parent=1 // pred_check
      _
    $region27: #{tpu_custom_call.1} parent=1 // pred_check_branch
      %995 = sbr.rel (0) target = $region29
    $region28: #{tpu_custom_call.1} parent=1 // pred_region
      %997 = dma.done [#allocation3], 256
    $region29: #{tpu_custom_call.1} parent=1 // pred_fallthru
      _
    %998 = vsyncpa [#allocation3], 1

</llo_original>
